<compile_context>
chip_gen: v7x
topology: tpu7x:2x2x1
jax: 0.10.0
libtpu: 0.0.40
codegen_flags: <defaults>
</compile_context>

<pallas_src>
import functools

import jax
import jax.numpy as jnp
from jax.experimental import pallas as pl
from jax.experimental.pallas import tpu as pltpu


def _bce_elem(z, y):
    # numerically-stable BCEWithLogitsLoss element-wise term:
    #   max(z, 0) - z*y + log1p(exp(-|z|))      (exp / log1p go to the EUP slot)
    return jnp.maximum(z, 0.0) - z * y + jnp.log1p(jnp.exp(-jnp.abs(z)))


def _fused_heads_kernel(xg_ref, xc_ref, w_ref, b_ref, yg_ref, yc_ref,
                        po_ref, cl_ref, loss_ref, acc_ref, *,
                        wb, wc, n_graphs, n_clauses, tile_nc):
    """Fused two-head linear + BCEWithLogitsLoss(mean) + weighted combine.

    Grid: 1-D over clause lane tiles.  Resident (constant-index) blocks:
      xg_ref  : (H, B)       graph features, rows on the lane axis     (VMEM)
      w_ref   : (H, 2)       packed [w_po | w_cl]                      (VMEM)
      b_ref   : (2,)         packed [b_po, b_cl]                       (SMEM)
      yg_ref  : (1, B)       binary targets for graphs                 (VMEM)
      po_ref  : (1, B)       graph logits (written once at i == 0)     (VMEM out)
      loss_ref: (3,)         [combined_loss, bl, cl]                   (SMEM out)
    Tiled blocks (block index = grid index):
      xc_ref  : (H, tile_nc) clause features for this tile             (VMEM)
      yc_ref  : (1, tile_nc) clause targets for this tile              (VMEM)
      cl_ref  : (1, tile_nc) clause logits for this tile               (VMEM out)
    Scratch:
      acc_ref : (2,) SMEM    [graph BCE sum, running clause BCE sum]
    wb, wc, n_graphs, n_clauses, tile_nc are compile-time Python constants.
    """
    i = pl.program_id(0)

    @pl.when(i == 0)
    def _():
        # Graph head (small, fits one resident block): compute once.
        # Output width 1 -> skip the MXU (it would be <1% utilized); VPU
        # multiply + XLU sublane reduction instead.
        zg = (jnp.sum(xg_ref[...] * w_ref[:, 0:1], axis=0, keepdims=True)
              + b_ref[0])                                        # (1, B)
        po_ref[...] = zg                                         # lane-dense vst
        acc_ref[0] = jnp.sum(_bce_elem(zg, yg_ref[...]))         # graph BCE sum
        acc_ref[1] = jnp.float32(0.0)                            # clause BCE sum

    # Clause head: current lane tile (unmasked full-lane load/store).
    zc = (jnp.sum(xc_ref[...] * w_ref[:, 1:2], axis=0, keepdims=True)
          + b_ref[1])                                            # (1, tile_nc)
    cl_ref[...] = zc

    # Exclude zero-padded lanes of the last tile from the loss (true clause
    # count is a compile-time constant).
    col = i * tile_nc + jax.lax.broadcasted_iota(jnp.int32, (1, tile_nc), 1)
    mask = (col < n_clauses).astype(jnp.float32)
    acc_ref[1] = acc_ref[1] + jnp.sum(_bce_elem(zc, yc_ref[...]) * mask)

    # Cheap scalar finalize every step; the last step's values are what gets
    # written back for the resident SMEM output block.
    bl = acc_ref[0] * (1.0 / n_graphs)
    clm = acc_ref[1] * (1.0 / n_clauses)
    loss_ref[0] = (bl * wb + clm * wc) * (1.0 / (wb + wc))
    loss_ref[1] = bl
    loss_ref[2] = clm


def fused_two_head_bce(graph_feats, clause_feats, w_po, w_cl, b_po, b_cl,
                       y, unsat_core, wb, wc, *, tile_nc=128):
    """One pallas_call computing both heads, both BCE losses and their combine.

    Returns (po_logits (B,1), clause_logits (NC,1), loss_vec (3,) = [loss, bl, cl]).
    tile_nc: clause lane-tile width (multiple of 128); raise to 256/512 for very
    large clause counts to amortize the ~0.35 us per-grid-step overhead.
    """
    B, H = graph_feats.shape
    NC, _ = clause_feats.shape
    assert tile_nc % 128 == 0

    # Layout plumbing in the wrapper: rows on the lane axis for lane-dense work.
    xg_t = graph_feats.T.astype(jnp.float32)                      # (H, B)
    xc_t = clause_feats.T.astype(jnp.float32)                     # (H, NC)
    w_packed = jnp.concatenate([w_po, w_cl], axis=1).astype(jnp.float32)   # (H, 2)
    b_packed = jnp.stack([b_po.reshape(()), b_cl.reshape(())]).astype(jnp.float32)  # (2,)
    yg_t = y.reshape(1, B).astype(jnp.float32)                    # (1, B)
    yc_t = unsat_core.reshape(1, NC).astype(jnp.float32)          # (1, NC)

    # Pad the clause lane axis to a multiple of the tile -> unmasked full-lane
    # accesses inside the kernel; padded lanes are masked out of the loss.
    nc_pad = ((NC + tile_nc - 1) // tile_nc) * tile_nc
    if nc_pad != NC:
        xc_t = jnp.pad(xc_t, ((0, 0), (0, nc_pad - NC)))
        yc_t = jnp.pad(yc_t, ((0, 0), (0, nc_pad - NC)))
    n_tiles = nc_pad // tile_nc

    n_total = B + nc_pad
    cost = pl.CostEstimate(
        flops=2 * n_total * H + 10 * n_total,
        transcendentals=2 * n_total,                  # exp + log1p per element
        bytes_accessed=4 * (n_total * H + 4 * n_total + 2 * H + 2 + 3),
    )

    kernel = functools.partial(
        _fused_heads_kernel,
        wb=float(wb), wc=float(wc),
        n_graphs=int(B), n_clauses=int(NC), tile_nc=int(tile_nc),
    )

    po_t, cl_t, loss_vec = pl.pallas_call(
        kernel,
        out_shape=(
            jax.ShapeDtypeStruct((1, B), jnp.float32),
            jax.ShapeDtypeStruct((1, nc_pad), jnp.float32),
            jax.ShapeDtypeStruct((3,), jnp.float32),
        ),
        grid_spec=pltpu.PrefetchScalarGridSpec(
            num_scalar_prefetch=0,
            grid=(n_tiles,),
            in_specs=[
                pl.BlockSpec((H, B), lambda i: (0, 0)),              # xg_t (resident)
                pl.BlockSpec((H, tile_nc), lambda i: (0, i)),        # xc_t (tiled)
                pl.BlockSpec((H, 2), lambda i: (0, 0)),              # w_packed
                pl.BlockSpec(memory_space=pltpu.MemorySpace.SMEM),   # b_packed
                pl.BlockSpec((1, B), lambda i: (0, 0)),              # yg_t (resident)
                pl.BlockSpec((1, tile_nc), lambda i: (0, i)),        # yc_t (tiled)
            ],
            out_specs=(
                pl.BlockSpec((1, B), lambda i: (0, 0)),              # po logits
                pl.BlockSpec((1, tile_nc), lambda i: (0, i)),        # clause logits
                pl.BlockSpec(memory_space=pltpu.MemorySpace.SMEM),   # loss vector
            ),
            scratch_shapes=[pltpu.SMEM((2,), jnp.float32)],          # BCE partial sums
        ),
        compiler_params=pltpu.CompilerParams(
            dimension_semantics=("arbitrary",)),                     # loss accumulates
        cost_estimate=cost,
    )(xg_t, xc_t, w_packed, b_packed, yg_t, yc_t)

    # Back to the module's (N, 1) logits convention (reshape = bitcast).
    po = po_t.reshape(B, 1)
    cl = cl_t[:, :NC].reshape(NC, 1)
    return po, cl, loss_vec


def model_with_loss_forward(params, batch, args):
    """Mirrors ModelWithLoss.forward (spc=True / spc_kl=False exercised branch)."""
    po_outputs, clause_outputs, loss_vec = fused_two_head_bce(
        batch["graph_feats"], batch["clause_feats"],
        params["w_po"], params["w_cl"], params["b_po"], params["b_cl"],
        batch["y"], batch["unsat_core"],
        args["binary_loss_weight"], args["clause_loss_weight"],
    )
    bl = loss_vec[1]

    if args["spc"]:
        if not args["spc_kl"]:
            loss = loss_vec[0]
            cl = loss_vec[2]
            loss_stats = {"loss": loss, "bl": bl, "cl": cl}
            task2_outputs = clause_outputs
        else:
            # TODO(synk): spc_kl=True branch (per-graph ragged softmax KL-div
            # with data-dependent offsets) not implemented in Pallas.
            raise NotImplementedError("spc_kl=True branch not implemented")
    else:
        # TODO(synk): spg branch (group head) not modeled in this instantiation.
        task2_outputs = batch["unsat_core"]
        loss = bl
        loss_stats = {"loss": loss}

    return po_outputs, task2_outputs, loss, loss_stats


def _reference(params, batch, args):
    """Pure-JAX reference for correctness checking."""
    def bce(z, y):
        return jnp.mean(jnp.maximum(z, 0.0) - z * y + jnp.log1p(jnp.exp(-jnp.abs(z))))

    po = batch["graph_feats"] @ params["w_po"] + params["b_po"]
    cz = batch["clause_feats"] @ params["w_cl"] + params["b_cl"]
    bl = bce(po, batch["y"])
    cl = bce(cz, batch["unsat_core"])
    wb, wc = args["binary_loss_weight"], args["clause_loss_weight"]
    return po, cz, (bl * wb + cl * wc) / (wb + wc), bl, cl


if __name__ == "__main__":
    # Small shapes; NC=200 deliberately exercises the multi-tile grid path
    # (2 clause tiles of 128 lanes, last tile padded + masked).
    B, H, NC = 8, 32, 200      # graphs, hidden dim, total clauses

    args = dict(spc=True, spc_kl=False,
                binary_loss_weight=1.0, clause_loss_weight=0.5)

    key = jax.random.PRNGKey(0)
    k1, k2, k3, k4, k5, k6 = jax.random.split(key, 6)

    batch = {
        "graph_feats":  jax.random.normal(k1, (B, H), dtype=jnp.float32),
        "clause_feats": jax.random.normal(k2, (NC, H), dtype=jnp.float32),
        "y":            jax.random.bernoulli(k3, 0.5, (B, 1)).astype(jnp.float32),
        "unsat_core":   jax.random.bernoulli(k4, 0.3, (NC, 1)).astype(jnp.float32),
    }

    params = {
        "w_po": 0.1 * jax.random.normal(k5, (H, 1), dtype=jnp.float32),
        "b_po": jnp.zeros((1, 1), dtype=jnp.float32),
        "w_cl": 0.1 * jax.random.normal(k6, (H, 1), dtype=jnp.float32),
        "b_cl": jnp.zeros((1, 1), dtype=jnp.float32),
    }

    po_outputs, task2_outputs, loss, loss_stats = model_with_loss_forward(
        params, batch, args
    )
    jax.block_until_ready((po_outputs, task2_outputs, loss))

    # verify against pure-JAX reference
    po_ref, cl_ref, loss_ref_val, bl_ref, cl_loss_ref = _reference(params, batch, args)
    assert po_outputs.shape == (B, 1) and task2_outputs.shape == (NC, 1)
    assert jnp.allclose(po_outputs, po_ref, atol=1e-5, rtol=1e-5)
    assert jnp.allclose(task2_outputs, cl_ref, atol=1e-5, rtol=1e-5)
    assert jnp.allclose(loss, loss_ref_val, atol=1e-5, rtol=1e-5)
    assert jnp.allclose(loss_stats["bl"], bl_ref, atol=1e-5, rtol=1e-5)
    assert jnp.allclose(loss_stats["cl"], cl_loss_ref, atol=1e-5, rtol=1e-5)

    print("KERNEL_OK")
</pallas_src>

<mosaic_0001>
module attributes {stable_mosaic.version = 11 : i64} {
  func.func @_fused_heads_kernel(%arg0: i32, %arg1: memref<32x8xf32, #tpu.memory_space<vmem>>, %arg2: memref<32x128xf32, #tpu.memory_space<vmem>>, %arg3: memref<32x2xf32, #tpu.memory_space<vmem>>, %arg4: memref<2xf32, #tpu.memory_space<smem>>, %arg5: memref<1x8xf32, #tpu.memory_space<vmem>>, %arg6: memref<1x128xf32, #tpu.memory_space<vmem>>, %arg7: memref<1x8xf32, #tpu.memory_space<vmem>>, %arg8: memref<1x128xf32, #tpu.memory_space<vmem>>, %arg9: memref<3xf32, #tpu.memory_space<smem>>, %arg10: memref<2xf32, #tpu.memory_space<smem>>) attributes {dimension_semantics = [#tpu.dimension_semantics<arbitrary>], iteration_bounds = array<i64: 2>, scalar_prefetch = 0 : i64, scratch_operands = 1 : i64, tpu.core_type = #tpu.core_type<tc>, window_params = [{pipeline_mode = #tpu.pipeline_mode<synchronous>, transform_indices = @transform_0, window_bounds = array<i64: 32, 8>}, {transform_indices = @transform_1, window_bounds = array<i64: 32, 128>}, {pipeline_mode = #tpu.pipeline_mode<synchronous>, transform_indices = @transform_2, window_bounds = array<i64: 32, 2>}, {transform_indices = @transform_3, window_bounds = array<i64: 2>}, {pipeline_mode = #tpu.pipeline_mode<synchronous>, transform_indices = @transform_4, window_bounds = array<i64: 1, 8>}, {transform_indices = @transform_5, window_bounds = array<i64: 1, 128>}, {pipeline_mode = #tpu.pipeline_mode<synchronous>, transform_indices = @transform_6, window_bounds = array<i64: 1, 8>}, {transform_indices = @transform_7, window_bounds = array<i64: 1, 128>}, {transform_indices = @transform_8, window_bounds = array<i64: 3>}]} {
    %c0_i32 = arith.constant 0 : i32
    %0 = arith.cmpi eq, %arg0, %c0_i32 : i32
    %1 = arith.extui %0 : i1 to i32
    %c0_i32_0 = arith.constant 0 : i32
    %2 = arith.cmpi ne, %1, %c0_i32_0 : i32
    scf.if %2 {
      %c0_22 = arith.constant 0 : index
      %c0_23 = arith.constant 0 : index
      %51 = vector.load %arg1[%c0_22, %c0_23] : memref<32x8xf32, #tpu.memory_space<vmem>>, vector<32x8xf32>
      %c0_24 = arith.constant 0 : index
      %c0_25 = arith.constant 0 : index
      %52 = vector.load %arg3[%c0_24, %c0_25] : memref<32x2xf32, #tpu.memory_space<vmem>>, vector<32x1xf32>
      %53 = vector.broadcast %52 : vector<32x1xf32> to vector<32x8xf32>
      %54 = arith.mulf %51, %53 : vector<32x8xf32>
      %cst_26 = arith.constant dense<0.000000e+00> : vector<8xf32>
      %55 = vector.multi_reduction <add>, %54, %cst_26 [0] : vector<32x8xf32> to vector<8xf32>
      %56 = vector.shape_cast %55 : vector<8xf32> to vector<1x8xf32>
      %c0_27 = arith.constant 0 : index
      %57 = memref.load %arg4[%c0_27] : memref<2xf32, #tpu.memory_space<smem>>
      %58 = vector.broadcast %57 : f32 to vector<1x8xf32>
      %59 = arith.addf %56, %58 : vector<1x8xf32>
      %c0_28 = arith.constant 0 : index
      %c0_29 = arith.constant 0 : index
      %60 = vector.load %arg7[%c0_28, %c0_29] : memref<1x8xf32, #tpu.memory_space<vmem>>, vector<1x8xf32>
      tpu.vector_store %arg7[%c0_28, %c0_29], %59 {strides = array<i32>} : memref<1x8xf32, #tpu.memory_space<vmem>>, vector<1x8xf32>,
      %c0_30 = arith.constant 0 : index
      %c0_31 = arith.constant 0 : index
      %61 = vector.load %arg5[%c0_30, %c0_31] : memref<1x8xf32, #tpu.memory_space<vmem>>, vector<1x8xf32>
      %cst_32 = arith.constant 0.000000e+00 : f32
      %62 = vector.broadcast %cst_32 : f32 to vector<1x8xf32>
      %63 = arith.maximumf %59, %62 : vector<1x8xf32>
      %64 = arith.mulf %59, %61 : vector<1x8xf32>
      %65 = arith.subf %63, %64 : vector<1x8xf32>
      %66 = math.absf %59 : vector<1x8xf32>
      %cst_33 = arith.constant 0.000000e+00 : f32
      %67 = vector.broadcast %cst_33 : f32 to vector<1x8xf32>
      %68 = arith.subf %67, %66 : vector<1x8xf32>
      %69 = math.exp %68 : vector<1x8xf32>
      %70 = math.log1p %69 : vector<1x8xf32>
      %71 = arith.addf %65, %70 : vector<1x8xf32>
      %72 = vector.shape_cast %71 : vector<1x8xf32> to vector<1x1x8xf32>
      %cst_34 = arith.constant dense<0.000000e+00> : vector<1xf32>
      %73 = vector.multi_reduction <add>, %72, %cst_34 [1, 2] : vector<1x1x8xf32> to vector<1xf32>
      %74 = vector.shape_cast %73 : vector<1xf32> to vector<1x1x1xf32>
      %75 = vector.extract %74[0, 0, 0] : f32 from vector<1x1x1xf32>
      %c0_35 = arith.constant 0 : index
      %76 = memref.load %arg10[%c0_35] : memref<2xf32, #tpu.memory_space<smem>>
      memref.store %75, %arg10[%c0_35] : memref<2xf32, #tpu.memory_space<smem>>
      %cst_36 = arith.constant 0.000000e+00 : f32
      %c1_37 = arith.constant 1 : index
      %77 = memref.load %arg10[%c1_37] : memref<2xf32, #tpu.memory_space<smem>>
      memref.store %cst_36, %arg10[%c1_37] : memref<2xf32, #tpu.memory_space<smem>>
    } else {
    }
    %c0 = arith.constant 0 : index
    %c0_1 = arith.constant 0 : index
    %3 = vector.load %arg2[%c0, %c0_1] : memref<32x128xf32, #tpu.memory_space<vmem>>, vector<32x128xf32>
    %c0_2 = arith.constant 0 : index
    %c1 = arith.constant 1 : index
    %4 = vector.load %arg3[%c0_2, %c1] : memref<32x2xf32, #tpu.memory_space<vmem>>, vector<32x1xf32>
    %5 = vector.broadcast %4 : vector<32x1xf32> to vector<32x128xf32>
    %6 = arith.mulf %3, %5 : vector<32x128xf32>
    %cst = arith.constant dense<0.000000e+00> : vector<128xf32>
    %7 = vector.multi_reduction <add>, %6, %cst [0] : vector<32x128xf32> to vector<128xf32>
    %8 = vector.shape_cast %7 : vector<128xf32> to vector<1x128xf32>
    %c1_3 = arith.constant 1 : index
    %9 = memref.load %arg4[%c1_3] : memref<2xf32, #tpu.memory_space<smem>>
    %10 = vector.broadcast %9 : f32 to vector<1x128xf32>
    %11 = arith.addf %8, %10 : vector<1x128xf32>
    %c0_4 = arith.constant 0 : index
    %c0_5 = arith.constant 0 : index
    %12 = vector.load %arg8[%c0_4, %c0_5] : memref<1x128xf32, #tpu.memory_space<vmem>>, vector<1x128xf32>
    tpu.vector_store %arg8[%c0_4, %c0_5], %11 {strides = array<i32>} : memref<1x128xf32, #tpu.memory_space<vmem>>, vector<1x128xf32>,
    %c128_i32 = arith.constant 128 : i32
    %13 = arith.muli %arg0, %c128_i32 : i32
    %14 = tpu.iota {dimensions = array<i32: 1>} : vector<1x128xi32>
    %15 = vector.broadcast %13 : i32 to vector<1x128xi32>
    %16 = arith.addi %15, %14 : vector<1x128xi32>
    %c200_i32 = arith.constant 200 : i32
    %17 = vector.broadcast %c200_i32 : i32 to vector<1x128xi32>
    %18 = arith.cmpi slt, %16, %17 : vector<1x128xi32>
    %19 = arith.extui %18 : vector<1x128xi1> to vector<1x128xi32>
    %20 = arith.sitofp %19 : vector<1x128xi32> to vector<1x128xf32>
    %c1_6 = arith.constant 1 : index
    %21 = memref.load %arg10[%c1_6] : memref<2xf32, #tpu.memory_space<smem>>
    %c0_7 = arith.constant 0 : index
    %c0_8 = arith.constant 0 : index
    %22 = vector.load %arg6[%c0_7, %c0_8] : memref<1x128xf32, #tpu.memory_space<vmem>>, vector<1x128xf32>
    %cst_9 = arith.constant 0.000000e+00 : f32
    %23 = vector.broadcast %cst_9 : f32 to vector<1x128xf32>
    %24 = arith.maximumf %11, %23 : vector<1x128xf32>
    %25 = arith.mulf %11, %22 : vector<1x128xf32>
    %26 = arith.subf %24, %25 : vector<1x128xf32>
    %27 = math.absf %11 : vector<1x128xf32>
    %cst_10 = arith.constant 0.000000e+00 : f32
    %28 = vector.broadcast %cst_10 : f32 to vector<1x128xf32>
    %29 = arith.subf %28, %27 : vector<1x128xf32>
    %30 = math.exp %29 : vector<1x128xf32>
    %31 = math.log1p %30 : vector<1x128xf32>
    %32 = arith.addf %26, %31 : vector<1x128xf32>
    %33 = arith.mulf %32, %20 : vector<1x128xf32>
    %34 = vector.shape_cast %33 : vector<1x128xf32> to vector<1x1x128xf32>
    %cst_11 = arith.constant dense<0.000000e+00> : vector<1xf32>
    %35 = vector.multi_reduction <add>, %34, %cst_11 [1, 2] : vector<1x1x128xf32> to vector<1xf32>
    %36 = vector.shape_cast %35 : vector<1xf32> to vector<1x1x1xf32>
    %37 = vector.extract %36[0, 0, 0] : f32 from vector<1x1x1xf32>
    %38 = arith.addf %21, %37 : f32
    %c1_12 = arith.constant 1 : index
    %39 = memref.load %arg10[%c1_12] : memref<2xf32, #tpu.memory_space<smem>>
    memref.store %38, %arg10[%c1_12] : memref<2xf32, #tpu.memory_space<smem>>
    %c0_13 = arith.constant 0 : index
    %40 = memref.load %arg10[%c0_13] : memref<2xf32, #tpu.memory_space<smem>>
    %cst_14 = arith.constant 1.250000e-01 : f32
    %41 = arith.mulf %40, %cst_14 : f32
    %c1_15 = arith.constant 1 : index
    %42 = memref.load %arg10[%c1_15] : memref<2xf32, #tpu.memory_space<smem>>
    %cst_16 = arith.constant 5.000000e-03 : f32
    %43 = arith.mulf %42, %cst_16 : f32
    %cst_17 = arith.constant 1.000000e+00 : f32
    %44 = arith.mulf %41, %cst_17 : f32
    %cst_18 = arith.constant 5.000000e-01 : f32
    %45 = arith.mulf %43, %cst_18 : f32
    %46 = arith.addf %44, %45 : f32
    %cst_19 = arith.constant 0.666666686 : f32
    %47 = arith.mulf %46, %cst_19 : f32
    %c0_20 = arith.constant 0 : index
    %48 = memref.load %arg9[%c0_20] : memref<3xf32, #tpu.memory_space<smem>>
    memref.store %47, %arg9[%c0_20] : memref<3xf32, #tpu.memory_space<smem>>
    %c1_21 = arith.constant 1 : index
    %49 = memref.load %arg9[%c1_21] : memref<3xf32, #tpu.memory_space<smem>>
    memref.store %41, %arg9[%c1_21] : memref<3xf32, #tpu.memory_space<smem>>
    %c2 = arith.constant 2 : index
    %50 = memref.load %arg9[%c2] : memref<3xf32, #tpu.memory_space<smem>>
    memref.store %43, %arg9[%c2] : memref<3xf32, #tpu.memory_space<smem>>
    return
  }
  func.func @transform_0(%arg0: i32) -> (i32, i32) {
    %c0_i32 = arith.constant 0 : i32
    %c0_i32_0 = arith.constant 0 : i32
    %c0_i32_1 = arith.constant 0 : i32
    return %c0_i32, %c0_i32_0 : i32, i32
  }
  func.func @transform_1(%arg0: i32) -> (i32, i32) {
    %c0_i32 = arith.constant 0 : i32
    %c0_i32_0 = arith.constant 0 : i32
    return %c0_i32, %arg0 : i32, i32
  }
  func.func @transform_2(%arg0: i32) -> (i32, i32) {
    %c0_i32 = arith.constant 0 : i32
    %c0_i32_0 = arith.constant 0 : i32
    %c0_i32_1 = arith.constant 0 : i32
    return %c0_i32, %c0_i32_0 : i32, i32
  }
  func.func @transform_3(%arg0: i32) -> i32 {
    %c0_i32 = arith.constant 0 : i32
    %c0_i32_0 = arith.constant 0 : i32
    return %c0_i32 : i32
  }
  func.func @transform_4(%arg0: i32) -> (i32, i32) {
    %c0_i32 = arith.constant 0 : i32
    %c0_i32_0 = arith.constant 0 : i32
    %c0_i32_1 = arith.constant 0 : i32
    return %c0_i32, %c0_i32_0 : i32, i32
  }
  func.func @transform_5(%arg0: i32) -> (i32, i32) {
    %c0_i32 = arith.constant 0 : i32
    %c0_i32_0 = arith.constant 0 : i32
    return %c0_i32, %arg0 : i32, i32
  }
  func.func @transform_6(%arg0: i32) -> (i32, i32) {
    %c0_i32 = arith.constant 0 : i32
    %c0_i32_0 = arith.constant 0 : i32
    %c0_i32_1 = arith.constant 0 : i32
    return %c0_i32, %c0_i32_0 : i32, i32
  }
  func.func @transform_7(%arg0: i32) -> (i32, i32) {
    %c0_i32 = arith.constant 0 : i32
    %c0_i32_0 = arith.constant 0 : i32
    return %c0_i32, %arg0 : i32, i32
  }
  func.func @transform_8(%arg0: i32) -> i32 {
    %c0_i32 = arith.constant 0 : i32
    %c0_i32_0 = arith.constant 0 : i32
    return %c0_i32 : i32
  }
}

</mosaic_0001>

<llo_original>
// kernel: tpu_custom_call.1
$region0: #{tpu_custom_call.1}
  #allocation0 [shape = 'u32[]', space=smem, size = 0x4, offset = 0x4, fixed_abs, tag = 'smem constant byte address 0x4 - core index']
  #allocation1 [shape = 'u32[144,128]{1,0:T(1,128)}', space=vmem, size = 0x12000, scoped, tag = 'internal scratch']
  #allocation2 [shape = 'f32[2]{0:T(128)}', space=smem, size = 0x200, scoped, tag = 'scratch operand']
  %s0 = inlined_call_operand.vmem [shape: f32[32,8], index: 0, kind: input, shape index: {}]
  %s1 = inlined_call_operand.vmem [shape: f32[32,256], index: 1, kind: input, shape index: {}]
  %s2 = inlined_call_operand.vmem [shape: f32[32,2], index: 2, kind: input, shape index: {}]
  %s3 = inlined_call_operand.vmem [shape: f32[2], index: 3, kind: input, shape index: {}]
  %s4 = inlined_call_operand.vmem [shape: f32[1,8], index: 4, kind: input, shape index: {}]
  %s5 = inlined_call_operand.vmem [shape: f32[1,256], index: 5, kind: input, shape index: {}]
  %s6 = inlined_call_operand.hbm [shape: f32[1,8], index: 6, kind: output, shape index: {0}]
  %s7 = inlined_call_operand.hbm [shape: f32[1,256], index: 7, kind: output, shape index: {1}]
  %s8 = inlined_call_operand.hbm [shape: f32[3], index: 8, kind: output, shape index: {2}]
  %9 = xla_tuple %s6, %s7, %s8
  %s10 = sld [smem:[#allocation0]]
  $region119: #{tpu_custom_call.1} parent=0
    _
  %s12 = ssub.s32 1, %s10
  %s13 = scalar_select 0, %s12, %s10
  $region1: #{tpu_custom_call.1} parent=0
    #allocation3 [shape = 'u8[32768]{0}', space=vmem, size = 0x8000, scoped, tag = 'input window, operand 1']
    #allocation4 [shape = 'u8[512]{0}', space=smem, size = 0x200, scoped, tag = 'input window, operand 3, single buffered']
    #allocation5 [shape = 's32[2]{0}', space=sflag, size = 0x8, scoped, tag = 'scoped memory for tpu_custom_call.1']
    #allocation6 [shape = 's32[2]{0}', space=sflag, size = 0x8, scoped, tag = 'scoped memory for tpu_custom_call.1']
    #allocation7 [shape = 's32[2]{0}', space=sflag, size = 0x8, scoped, tag = 'scoped memory for tpu_custom_call.1']
    #allocation8 [shape = 'u8[512]{0}', space=vmem, size = 0x400, scoped, tag = 'output window, operand 0, single buffered']
    #allocation9 [shape = 'u8[1024]{0}', space=vmem, size = 0x400, scoped, tag = 'output window, operand 1']
    #allocation10 [shape = 's32[2]{0}', space=sflag, size = 0x8, scoped, tag = 'scoped memory for tpu_custom_call.1']
    #allocation11 [shape = 'u8[512]{0}', space=smem, size = 0x200, scoped, tag = 'output window, operand 2, single buffered']
    %14 = vsyncpa [#allocation7], 0
    %15 = vsyncpa [#allocation5], 0
    %16 = vsyncpa [#allocation10], 0
    %s17 = scalar_lea.sflag [#allocation10], 1
    %18 = vsyncpa %s17, 0
    %19 = vsyncpa [#allocation6], 0
    loop: start=0, step=1, limit=4
    $region2: #{tpu_custom_call.1} parent=1 // loop_pre_header
      _
    $region3: #{tpu_custom_call.1} parent=1 // loop_header
      %s21 = sphi 0, %s25
      %p22 = scmp.ge.s32.totalorder %s21, 4
      %s29 = sphi 0, %s29
      %s31 = sphi 0, %s29
      %s32 = sphi 0, %s31
      %s46 = sphi 0, %s32
      %s52 = sphi 0, %s54
      %s55 = sphi 0, %s52
      %s56 = sphi 0, %s55
      %s72 = sphi 0, %s56
      %s76 = sphi 0, %s76
      %s78 = sphi 0, %s76
      %s79 = sphi 0, %s78
      %s93 = sphi 0, %s79
      %s97 = sphi 0, %s97
      %s99 = sphi 0, %s97
      %s100 = sphi 0, %s99
      %s114 = sphi 0, %s100
      %s118 = sphi 0, %s118
      %s120 = sphi 0, %s118
      %s121 = sphi 0, %s120
      %s135 = sphi 0, %s121
      %s141 = sphi 0, %s143
      %s144 = sphi 0, %s141
      %s145 = sphi 0, %s144
      %s161 = sphi 0, %s145
      %s165 = sphi 0, %s165
      %s167 = sphi 0, %s165
      %s168 = sphi 0, %s167
      %s182 = sphi 0, %s168
      %s188 = sphi 0, %s190
      %s191 = sphi 0, %s188
      %s192 = sphi 0, %s191
      %s208 = sphi 0, %s192
      %s212 = sphi 0, %s212
      %s214 = sphi 0, %s212
      %s215 = sphi 0, %s214
      %s229 = sphi 0, %s215
    $region4: #{tpu_custom_call.1} parent=1 // loop_header_branch
      %24 = sbr.rel (%p22) target = $region8
    $region5: #{tpu_custom_call.1} parent=1 // loop_body
      %s26 = ssub.s32 %s21, 1
      %s27 = ssub.s32 %s21, 2
      %s28 = sadd.s32 %s21, 1
      %s30 = sadd.s32 %s29, 1
      %p33 = scmp.eq.s32.totalorder %s21, 1
      %p34 = scmp.ne.s32.totalorder %s29, %s31
      %p35 = scmp.eq.s32.totalorder %s21, 0
      %p36 = por %p34, %p35
      %p37 = scmp.ne.s32.totalorder %s29, %s31
      %p38 = scmp.eq.s32.totalorder %s26, 1
      %p39 = por %p37, %p38
      %p40 = scmp.ne.s32.totalorder %s31, %s32
      %p41 = scmp.eq.s32.totalorder %s26, 0
      %p42 = por %p40, %p41
      %p43 = scmp.ne.s32.totalorder %s31, %s32
      %p44 = scmp.eq.s32.totalorder %s27, 1
      %p45 = por %p43, %p44
      %p47 = scmp.ne.s32.totalorder %s32, %s46
      %p48 = scmp.eq.s32.totalorder %s27, 0
      %p49 = por %p47, %p48
      %s50 = ssub.s32 %s21, %s28
      %p51 = scmp.eq.s32.totalorder %s50, 0
      %s53 = sadd.s32 %s52, 1
      %s54 = scalar_select %p51, %s52, %s53
      %p57 = pneg %p51
      %p58 = scmp.eq.s32.totalorder %s21, 1
      %p59 = por %p57, %p58
      %p60 = scmp.ne.s32.totalorder %s52, %s55
      %p61 = scmp.eq.s32.totalorder %s21, 0
      %p62 = por %p60, %p61
      %p63 = scmp.ne.s32.totalorder %s52, %s55
      %p64 = scmp.eq.s32.totalorder %s26, 1
      %p65 = por %p63, %p64
      %p66 = scmp.ne.s32.totalorder %s55, %s56
      %p67 = scmp.eq.s32.totalorder %s26, 0
      %p68 = por %p66, %p67
      %p69 = scmp.ne.s32.totalorder %s55, %s56
      %p70 = scmp.eq.s32.totalorder %s27, 1
      %p71 = por %p69, %p70
      %p73 = scmp.ne.s32.totalorder %s56, %s72
      %p74 = scmp.eq.s32.totalorder %s27, 0
      %p75 = por %p73, %p74
      %s77 = sadd.s32 %s76, 1
      %p80 = scmp.eq.s32.totalorder %s21, 1
      %p81 = scmp.ne.s32.totalorder %s76, %s78
      %p82 = scmp.eq.s32.totalorder %s21, 0
      %p83 = por %p81, %p82
      %p84 = scmp.ne.s32.totalorder %s76, %s78
      %p85 = scmp.eq.s32.totalorder %s26, 1
      %p86 = por %p84, %p85
      %p87 = scmp.ne.s32.totalorder %s78, %s79
      %p88 = scmp.eq.s32.totalorder %s26, 0
      %p89 = por %p87, %p88
      %p90 = scmp.ne.s32.totalorder %s78, %s79
      %p91 = scmp.eq.s32.totalorder %s27, 1
      %p92 = por %p90, %p91
      %p94 = scmp.ne.s32.totalorder %s79, %s93
      %p95 = scmp.eq.s32.totalorder %s27, 0
      %p96 = por %p94, %p95
      %s98 = sadd.s32 %s97, 1
      %p101 = scmp.eq.s32.totalorder %s21, 1
      %p102 = scmp.ne.s32.totalorder %s97, %s99
      %p103 = scmp.eq.s32.totalorder %s21, 0
      %p104 = por %p102, %p103
      %p105 = scmp.ne.s32.totalorder %s97, %s99
      %p106 = scmp.eq.s32.totalorder %s26, 1
      %p107 = por %p105, %p106
      %p108 = scmp.ne.s32.totalorder %s99, %s100
      %p109 = scmp.eq.s32.totalorder %s26, 0
      %p110 = por %p108, %p109
      %p111 = scmp.ne.s32.totalorder %s99, %s100
      %p112 = scmp.eq.s32.totalorder %s27, 1
      %p113 = por %p111, %p112
      %p115 = scmp.ne.s32.totalorder %s100, %s114
      %p116 = scmp.eq.s32.totalorder %s27, 0
      %p117 = por %p115, %p116
      %s119 = sadd.s32 %s118, 1
      %p122 = scmp.eq.s32.totalorder %s21, 1
      %p123 = scmp.ne.s32.totalorder %s118, %s120
      %p124 = scmp.eq.s32.totalorder %s21, 0
      %p125 = por %p123, %p124
      %p126 = scmp.ne.s32.totalorder %s118, %s120
      %p127 = scmp.eq.s32.totalorder %s26, 1
      %p128 = por %p126, %p127
      %p129 = scmp.ne.s32.totalorder %s120, %s121
      %p130 = scmp.eq.s32.totalorder %s26, 0
      %p131 = por %p129, %p130
      %p132 = scmp.ne.s32.totalorder %s120, %s121
      %p133 = scmp.eq.s32.totalorder %s27, 1
      %p134 = por %p132, %p133
      %p136 = scmp.ne.s32.totalorder %s121, %s135
      %p137 = scmp.eq.s32.totalorder %s27, 0
      %p138 = por %p136, %p137
      %s139 = ssub.s32 %s21, %s28
      %p140 = scmp.eq.s32.totalorder %s139, 0
      %s142 = sadd.s32 %s141, 1
      %s143 = scalar_select %p140, %s141, %s142
      %p146 = pneg %p140
      %p147 = scmp.eq.s32.totalorder %s21, 1
      %p148 = por %p146, %p147
      %p149 = scmp.ne.s32.totalorder %s141, %s144
      %p150 = scmp.eq.s32.totalorder %s21, 0
      %p151 = por %p149, %p150
      %p152 = scmp.ne.s32.totalorder %s141, %s144
      %p153 = scmp.eq.s32.totalorder %s26, 1
      %p154 = por %p152, %p153
      %p155 = scmp.ne.s32.totalorder %s144, %s145
      %p156 = scmp.eq.s32.totalorder %s26, 0
      %p157 = por %p155, %p156
      %p158 = scmp.ne.s32.totalorder %s144, %s145
      %p159 = scmp.eq.s32.totalorder %s27, 1
      %p160 = por %p158, %p159
      %p162 = scmp.ne.s32.totalorder %s145, %s161
      %p163 = scmp.eq.s32.totalorder %s27, 0
      %p164 = por %p162, %p163
      %s166 = sadd.s32 %s165, 1
      %p169 = scmp.eq.s32.totalorder %s21, 1
      %p170 = scmp.ne.s32.totalorder %s165, %s167
      %p171 = scmp.eq.s32.totalorder %s21, 0
      %p172 = por %p170, %p171
      %p173 = scmp.ne.s32.totalorder %s165, %s167
      %p174 = scmp.eq.s32.totalorder %s26, 1
      %p175 = por %p173, %p174
      %p176 = scmp.ne.s32.totalorder %s167, %s168
      %p177 = scmp.eq.s32.totalorder %s26, 0
      %p178 = por %p176, %p177
      %p179 = scmp.ne.s32.totalorder %s167, %s168
      %p180 = scmp.eq.s32.totalorder %s27, 1
      %p181 = por %p179, %p180
      %p183 = scmp.ne.s32.totalorder %s168, %s182
      %p184 = scmp.eq.s32.totalorder %s27, 0
      %p185 = por %p183, %p184
      %s186 = ssub.s32 %s21, %s28
      %p187 = scmp.eq.s32.totalorder %s186, 0
      %s189 = sadd.s32 %s188, 1
      %s190 = scalar_select %p187, %s188, %s189
      %p193 = pneg %p187
      %p194 = scmp.eq.s32.totalorder %s21, 1
      %p195 = por %p193, %p194
      %p196 = scmp.ne.s32.totalorder %s188, %s191
      %p197 = scmp.eq.s32.totalorder %s21, 0
      %p198 = por %p196, %p197
      %p199 = scmp.ne.s32.totalorder %s188, %s191
      %p200 = scmp.eq.s32.totalorder %s26, 1
      %p201 = por %p199, %p200
      %p202 = scmp.ne.s32.totalorder %s191, %s192
      %p203 = scmp.eq.s32.totalorder %s26, 0
      %p204 = por %p202, %p203
      %p205 = scmp.ne.s32.totalorder %s191, %s192
      %p206 = scmp.eq.s32.totalorder %s27, 1
      %p207 = por %p205, %p206
      %p209 = scmp.ne.s32.totalorder %s192, %s208
      %p210 = scmp.eq.s32.totalorder %s27, 0
      %p211 = por %p209, %p210
      %s213 = sadd.s32 %s212, 1
      %p216 = scmp.eq.s32.totalorder %s21, 1
      %p217 = scmp.ne.s32.totalorder %s212, %s214
      %p218 = scmp.eq.s32.totalorder %s21, 0
      %p219 = por %p217, %p218
      %p220 = scmp.ne.s32.totalorder %s212, %s214
      %p221 = scmp.eq.s32.totalorder %s26, 1
      %p222 = por %p220, %p221
      %p223 = scmp.ne.s32.totalorder %s214, %s215
      %p224 = scmp.eq.s32.totalorder %s26, 0
      %p225 = por %p223, %p224
      %p226 = scmp.ne.s32.totalorder %s214, %s215
      %p227 = scmp.eq.s32.totalorder %s27, 1
      %p228 = por %p226, %p227
      %p230 = scmp.ne.s32.totalorder %s215, %s229
      %p231 = scmp.eq.s32.totalorder %s27, 0
      %p232 = por %p230, %p231
      %p233 = scmp.le.s32.totalorder 1, %s21
      %p234 = scmp.lt.s32.totalorder %s21, 3
      %p235 = pnand %p233, %p234
      %p236 = pneg %p235
      // Predicated region
      $region9: #{tpu_custom_call.1} parent=5 // pred_check
        _
      $region10: #{tpu_custom_call.1} parent=5 // pred_check_branch
        %238 = sbr.rel (%p235) target = $region12
      $region11: #{tpu_custom_call.1} parent=5 // pred_region
        %s239 = ssub.s32 %s21, 1
        // Predicated region
        $region13: #{tpu_custom_call.1} parent=11 // pred_check
          %p240 = pneg %p42
        $region14: #{tpu_custom_call.1} parent=11 // pred_check_branch
          %242 = sbr.rel (%p240) target = $region16
        $region15: #{tpu_custom_call.1} parent=11 // pred_region
          _
        $region16: #{tpu_custom_call.1} parent=11 // pred_fallthru
          _
        // Predicated region
        $region17: #{tpu_custom_call.1} parent=11 // pred_check
          %p243 = pneg %p89
        $region18: #{tpu_custom_call.1} parent=11 // pred_check_branch
          %245 = sbr.rel (%p243) target = $region20
        $region19: #{tpu_custom_call.1} parent=11 // pred_region
          _
        $region20: #{tpu_custom_call.1} parent=11 // pred_fallthru
          _
        // Predicated region
        $region21: #{tpu_custom_call.1} parent=11 // pred_check
          %p246 = pneg %p110
        $region22: #{tpu_custom_call.1} parent=11 // pred_check_branch
          %248 = sbr.rel (%p246) target = $region24
        $region23: #{tpu_custom_call.1} parent=11 // pred_region
          %s250 = ssub.s32 16, 16
          %251 = vsyncadd [#allocation7], %s250
          %s253 = sshll.u32 %s3, 4
          %s254 = int_to_ptr.vmem [resolvable:$true] %s253
          %256 = dma.vmem_to_smem %s254, 16, [#allocation4], [#allocation7]
        $region24: #{tpu_custom_call.1} parent=11 // pred_fallthru
          _
        // Predicated region
        $region25: #{tpu_custom_call.1} parent=11 // pred_check
          %p257 = pneg %p131
        $region26: #{tpu_custom_call.1} parent=11 // pred_check_branch
          %259 = sbr.rel (%p257) target = $region28
        $region27: #{tpu_custom_call.1} parent=11 // pred_region
          _
        $region28: #{tpu_custom_call.1} parent=11 // pred_fallthru
          _
      $region12: #{tpu_custom_call.1} parent=5 // pred_fallthru
        _
      %p260 = scmp.lt.s32.totalorder %s21, 2
      // Predicated region
      $region29: #{tpu_custom_call.1} parent=5 // pred_check
        %p261 = pneg %p260
      $region30: #{tpu_custom_call.1} parent=5 // pred_check_branch
        %263 = sbr.rel (%p261) target = $region32
      $region31: #{tpu_custom_call.1} parent=5 // pred_region
        // Predicated region
        $region33: #{tpu_custom_call.1} parent=31 // pred_check
          %p264 = pneg %p62
        $region34: #{tpu_custom_call.1} parent=31 // pred_check_branch
          %266 = sbr.rel (%p264) target = $region36
        $region35: #{tpu_custom_call.1} parent=31 // pred_region
          %s267 = sand.u32 %s52, 1
          %s268 = sand.u32 %s52, 1
          %s269 = smul.addr %s268, 32
          %s270 = scalar_lea.vmem [#allocation3], %s269
          %s271 = smul.addr %s21, 8
          %s272 = scalar_lea.vmem %s1, %s271
          // Predicated region
          $region37: #{tpu_custom_call.1} parent=35 // pred_check
            _
          $region38: #{tpu_custom_call.1} parent=35 // pred_check_branch
            %274 = sbr.rel (0) target = $region40
          $region39: #{tpu_custom_call.1} parent=35 // pred_region
            // Predicated region
            $region41: #{tpu_custom_call.1} parent=39 // pred_check
              _
            $region42: #{tpu_custom_call.1} parent=39 // pred_check_branch
              %276 = sbr.rel (0) target = $region44
            $region43: #{tpu_custom_call.1} parent=39 // pred_region
              // Predicated region
              $region56: #{tpu_custom_call.1} parent=43 // pred_check
                _
              $region57: #{tpu_custom_call.1} parent=43 // pred_check_branch
                %297 = sbr.rel (0) target = $region59
              $region58: #{tpu_custom_call.1} parent=43 // pred_region
                loop: start=0, step=1, limit=1
                $region60: #{tpu_custom_call.1} parent=58 // loop_pre_header
                  _
                $region61: #{tpu_custom_call.1} parent=58 // loop_header
                  %s299 = sphi 0, %s303
                  %p300 = scmp.ge.s32.totalorder %s299, 1
                  %s304 = sphi %s272, %s272
                  %s305 = sphi %s270, %s270
                $region62: #{tpu_custom_call.1} parent=58 // loop_header_branch
                  %302 = sbr.rel (%p300) target = $region66
                $region63: #{tpu_custom_call.1} parent=58 // loop_body
                  %v306 = vld [vmem:[%s304] sm:$0xff]
                  %307 = vst [vmem:[%s305] sm:$0xff] %v306
                  %v308 = vld [vmem:[%s304 + $0x10] sm:$0xff]
                  %309 = vst [vmem:[%s305 + $0x8] sm:$0xff] %v308
                  %v310 = vld [vmem:[%s304 + $0x20] sm:$0xff]
                  %311 = vst [vmem:[%s305 + $0x10] sm:$0xff] %v310
                  %v312 = vld [vmem:[%s304 + $0x30] sm:$0xff]
                  %313 = vst [vmem:[%s305 + $0x18] sm:$0xff] %v312
                $region64: #{tpu_custom_call.1} parent=58 // loop_footer
                  %s303 = sadd.s32 1, %s299
                $region65: #{tpu_custom_call.1} parent=58 // loop_footer_branch
                  %298 = sbr.rel target = $region61
                $region66: #{tpu_custom_call.1} parent=58 // loop_exit
                  _
              $region59: #{tpu_custom_call.1} parent=43 // pred_fallthru
                _
              // Predicated region
              $region67: #{tpu_custom_call.1} parent=43 // pred_check
                _
              $region68: #{tpu_custom_call.1} parent=43 // pred_check_branch
                %315 = sbr.rel target = $region70
              $region69: #{tpu_custom_call.1} parent=43 // pred_region
                _
              $region70: #{tpu_custom_call.1} parent=43 // pred_fallthru
                _
            $region44: #{tpu_custom_call.1} parent=39 // pred_fallthru
              _
            // Predicated region
            $region45: #{tpu_custom_call.1} parent=39 // pred_check
              _
            $region46: #{tpu_custom_call.1} parent=39 // pred_check_branch
              %278 = sbr.rel target = $region48
            $region47: #{tpu_custom_call.1} parent=39 // pred_region
              loop: start=0, step=1, limit=1
              $region49: #{tpu_custom_call.1} parent=47 // loop_pre_header
                _
              $region50: #{tpu_custom_call.1} parent=47 // loop_header
                %s281 = sphi 0, %s285
                %p282 = scmp.ge.s32.totalorder %s281, 1
                %s286 = sphi %s272, %s272
                %s287 = sphi %s270, %s270
              $region51: #{tpu_custom_call.1} parent=47 // loop_header_branch
                %284 = sbr.rel (%p282) target = $region55
              $region52: #{tpu_custom_call.1} parent=47 // loop_body
                %v288 = vld [vmem:[%s286] sm:$0xff]
                %289 = vst [vmem:[%s287] sm:$0xff] %v288
                %v290 = vld [vmem:[%s286 + $0x10] sm:$0xff]
                %291 = vst [vmem:[%s287 + $0x8] sm:$0xff] %v290
                %v292 = vld [vmem:[%s286 + $0x20] sm:$0xff]
                %293 = vst [vmem:[%s287 + $0x10] sm:$0xff] %v292
                %v294 = vld [vmem:[%s286 + $0x30] sm:$0xff]
                %295 = vst [vmem:[%s287 + $0x18] sm:$0xff] %v294
              $region53: #{tpu_custom_call.1} parent=47 // loop_footer
                %s285 = sadd.s32 1, %s281
              $region54: #{tpu_custom_call.1} parent=47 // loop_footer_branch
                %280 = sbr.rel target = $region50
              $region55: #{tpu_custom_call.1} parent=47 // loop_exit
                _
            $region48: #{tpu_custom_call.1} parent=39 // pred_fallthru
              _
          $region40: #{tpu_custom_call.1} parent=35 // pred_fallthru
            _
          %316 = vnop
        $region36: #{tpu_custom_call.1} parent=31 // pred_fallthru
          _
        // Predicated region
        $region71: #{tpu_custom_call.1} parent=31 // pred_check
          %p317 = pneg %p151
        $region72: #{tpu_custom_call.1} parent=31 // pred_check_branch
          %319 = sbr.rel (%p317) target = $region74
        $region73: #{tpu_custom_call.1} parent=31 // pred_region
          %p320 = scmp.lt.s32.totalorder %s21, 1
          %s321 = scalar_select %p320, %s21, 1
          %s322 = scalar_lea.vmem %s5, %s321
        $region74: #{tpu_custom_call.1} parent=31 // pred_fallthru
          _
      $region32: #{tpu_custom_call.1} parent=5 // pred_fallthru
        _
      %p323 = scmp.le.s32.totalorder 1, %s21
      %p324 = scmp.lt.s32.totalorder %s21, 3
      %p325 = pnand %p323, %p324
      %p326 = pneg %p325
      // Predicated region
      $region75: #{tpu_custom_call.1} parent=5 // pred_check
        _
      $region76: #{tpu_custom_call.1} parent=5 // pred_check_branch
        %328 = sbr.rel (%p325) target = $region78
      $region77: #{tpu_custom_call.1} parent=5 // pred_region
        %s329 = ssub.s32 %s21, 1
        %s330 = sand.u32 %s55, 1
        %s331 = sand.u32 %s55, 1
        %s332 = smul.addr %s331, 32
        %s333 = scalar_lea.vmem [#allocation3], %s332
        // Predicated region
        $region79: #{tpu_custom_call.1} parent=77 // pred_check
          %p334 = pneg %p68
        $region80: #{tpu_custom_call.1} parent=77 // pred_check_branch
          %336 = sbr.rel (%p334) target = $region82
        $region81: #{tpu_custom_call.1} parent=77 // pred_region
          _
        $region82: #{tpu_custom_call.1} parent=77 // pred_fallthru
          _
        // Predicated region
        $region83: #{tpu_custom_call.1} parent=77 // pred_check
          %p337 = pneg %p110
        $region84: #{tpu_custom_call.1} parent=77 // pred_check_branch
          %339 = sbr.rel (%p337) target = $region86
        $region85: #{tpu_custom_call.1} parent=77 // pred_region
          %340 = dma.done [#allocation7], 16
        $region86: #{tpu_custom_call.1} parent=77 // pred_fallthru
          _
        %341 = sfence
        %p342 = pneg %p42
        %p343 = pneg %p39
        %s344 = sand.u32 %s55, 1
        %s345 = sand.u32 %s55, 1
        %s346 = smul.addr %s345, 32
        %s347 = scalar_lea.vmem [#allocation3], %s346
        %p348 = pneg %p68
        %p349 = pneg %p65
        %p350 = pneg %p89
        %p351 = pneg %p86
        %p352 = pneg %p110
        %p353 = pneg %p107
        %p354 = pneg %p131
        %p355 = pneg %p128
        %p356 = scmp.lt.s32.totalorder %s26, 1
        %s357 = scalar_select %p356, %s26, 1
        %s358 = scalar_lea.vmem %s5, %s357
        %p359 = pneg %p157
        %p360 = pneg %p154
        %p361 = pneg %p178
        %p362 = pneg %p175
        %p363 = pneg %p204
        %p364 = pneg %p201
        %s365 = sand.u32 %s191, 1
        %s366 = scalar_lea.sflag [#allocation10], %s365
        %s367 = sand.u32 %s191, 1
        %s368 = scalar_lea.vmem [#allocation9], %s367
        %p369 = pneg %p225
        %p370 = pneg %p222
        %p371 = scmp.lt.s32.totalorder %s26, 1
        %s372 = scalar_select %p371, %s26, 1
        %s373 = scalar_lea.vmem %s5, %s372
        %p374 = scmp.eq.s32.totalorder %s26, 0
        // Predicated region
        $region87: #{tpu_custom_call.1} parent=77 // pred_check
          %p375 = pneg %p374
        $region88: #{tpu_custom_call.1} parent=77 // pred_check_branch
          %377 = sbr.rel (%p375) target = $region90
        $region89: #{tpu_custom_call.1} parent=77 // pred_region
          %v378 = vld [vmem:[%s0] sm:$0xff]
          %v379 = vld [vmem:[%s0 + $0x8] sm:$0xff]
          %v380 = vld [vmem:[%s0 + $0x10] sm:$0xff]
          %v381 = vld [vmem:[%s0 + $0x18] sm:$0xff]
          %v382 = vld [vmem:[%s2] sm:$0xff]
          %v383 = vld [vmem:[%s2 + $0x8] sm:$0xff]
          %v384 = vld [vmem:[%s2 + $0x10] sm:$0xff]
          %v385 = vld [vmem:[%s2 + $0x18] sm:$0xff]
          %387 = vset.pattern.permute.xlu0 0
          %388 = vperm.xlu0 %387, %v382
          %v389 = vpop.permute.xlu0 %388
          %392 = vset.pattern.permute.xlu0 0
          %393 = vperm.xlu0 %392, %v383
          %v394 = vpop.permute.xlu0 %393
          %397 = vset.pattern.permute.xlu0 0
          %398 = vperm.xlu0 %397, %v384
          %v399 = vpop.permute.xlu0 %398
          %402 = vset.pattern.permute.xlu0 0
          %403 = vperm.xlu0 %402, %v385
          %v404 = vpop.permute.xlu0 %403
          %v406 = vmul.f32 %v378, %v389
          %v407 = vmul.f32 %v379, %v394
          %v408 = vmul.f32 %v380, %v399
          %v409 = vmul.f32 %v381, %v404
          %vm410 = vcmask 64512
          %v411 = vsel %vm410, %v406, 0.0
          %v412 = vsel %vm410, %v407, 0.0
          %v413 = vadd.f32 %v411, %v412
          %v414 = vsel %vm410, %v408, 0.0
          %v415 = vadd.f32 %v413, %v414
          %v416 = vsel %vm410, %v409, 0.0
          %v417 = vadd.f32 %v415, %v416
          %v418 = vrot.slane %v417, 4
          %v419 = vadd.f32 %v417, %v418
          %v420 = vrot.slane %v419, 2
          %v421 = vadd.f32 %v419, %v420
          %v422 = vrot.slane %v421, 1
          %v423 = vadd.f32 %v421, %v422
          %s424 = sld [smem:[#allocation4]]
          %v425 = vstv %s424
          %v426 = vadd.f32 %v423, %v425
          %vm427 = vcmask 57344
          %428 = vst.msk [vmem:[#allocation8] sm:$0x1] %vm427, %v426
          %v429 = vld [vmem:[%s4] sm:$0x1]
          %v430 = vmax.f32 %v426, 0.0
          %v431 = vmul.f32 %v426, %v429
          %v432 = vsub.f32 %v430, %v431
          %v433 = vand.u32 2147483647, %v426
          %v434 = vsub.f32 0.0, %v433
          %v435 = vmul.f32 %v434, 1.442695
          %v436 = vpow.pop %v435
          %v437 = vadd.f32 %v436, 1.0
          %v438 = vlog2.pop %v437
          %v439 = vmul.f32 %v438, 0.6931472
          %v440 = vmul.f32 -0.5, %v436
          %v441 = vadd.f32 %v440, 1.0
          %v442 = vmul.f32 %v441, %v436
          %v443 = vand.u32 2147483647, %v436
          %vm444 = vcmp.lt.f32.partialorder %v443, 0.0004427343
          %v445 = vsel %vm444, %v442, %v439
          %v446 = vadd.f32 %v432, %v445
          %v447 = vsel %vm427, %v446, 0.0
          %448 = vadd.xlane.f32.xlu0 %v447
          %v449 = vpop.xlane.xlu0 %448
          %v450 = vrot.slane %v449, 4
          %v451 = vadd.f32 %v449, %v450
          %v452 = vrot.slane %v451, 2
          %v453 = vadd.f32 %v451, %v452
          %v454 = vrot.slane %v453, 1
          %v455 = vadd.f32 %v453, %v454
          %s456 = vtos %v455
          %s457 = scalar_lea.smem [#allocation2], 0
          %458 = sst [smem:[%s457]] %s456
          %s459 = scalar_lea.smem [#allocation2], 1
          %460 = sst [smem:[%s459]] 0.0
        $region90: #{tpu_custom_call.1} parent=77 // pred_fallthru
          _
        %v461 = vld [vmem:[%s333] sm:$0xff]
        %v462 = vld [vmem:[%s333 + $0x8] sm:$0xff]
        %v463 = vld [vmem:[%s333 + $0x10] sm:$0xff]
        %v464 = vld [vmem:[%s333 + $0x18] sm:$0xff]
        %v465 = vld [vmem:[%s2] sm:$0xff]
        %v466 = vld [vmem:[%s2 + $0x8] sm:$0xff]
        %v467 = vld [vmem:[%s2 + $0x10] sm:$0xff]
        %v468 = vld [vmem:[%s2 + $0x18] sm:$0xff]
        %470 = vset.pattern.permute.xlu0 1
        %471 = vperm.xlu0 %470, %v465
        %v472 = vpop.permute.xlu0 %471
        %475 = vset.pattern.permute.xlu0 1
        %476 = vperm.xlu0 %475, %v466
        %v477 = vpop.permute.xlu0 %476
        %480 = vset.pattern.permute.xlu0 1
        %481 = vperm.xlu0 %480, %v467
        %v482 = vpop.permute.xlu0 %481
        %485 = vset.pattern.permute.xlu0 1
        %486 = vperm.xlu0 %485, %v468
        %v487 = vpop.permute.xlu0 %486
        %v489 = vmul.f32 %v461, %v472
        %v490 = vmul.f32 %v462, %v477
        %v491 = vmul.f32 %v463, %v482
        %v492 = vmul.f32 %v464, %v487
        %v493 = vadd.f32 %v489, %v490
        %v494 = vadd.f32 %v493, %v491
        %v495 = vadd.f32 %v494, %v492
        %v496 = vrot.slane %v495, 4
        %v497 = vadd.f32 %v495, %v496
        %v498 = vrot.slane %v497, 2
        %v499 = vadd.f32 %v497, %v498
        %v500 = vrot.slane %v499, 1
        %v501 = vadd.f32 %v499, %v500
        %s502 = sld [smem:[#allocation4 + $0x1]]
        %v503 = vstv %s502
        %v504 = vadd.f32 %v501, %v503
        %505 = vst [vmem:[%s368] sm:$0x1] %v504
        %s506 = smul.u32 %s26, 128
        %v507 = vlaneseq
        %v508 = vand.u32 %v507, 127
        %v509 = vstv %s506
        %v510 = vadd.s32 %v509, %v508
        %vm511 = vcmp.lt.s32.totalorder %v510, 200
        %v512 = vsel %vm511, 1, 0
        %v513 = vcvt.s32.f32 %v512
        %s514 = sld [smem:[#allocation2 + $0x1]]
        %v515 = vld [vmem:[%s373] sm:$0x1]
        %v516 = vmax.f32 %v504, 0.0
        %v517 = vmul.f32 %v504, %v515
        %v518 = vsub.f32 %v516, %v517
        %v519 = vand.u32 2147483647, %v504
        %v520 = vsub.f32 0.0, %v519
        %v521 = vmul.f32 %v520, 1.442695
        %v522 = vpow.pop %v521
        %v523 = vadd.f32 %v522, 1.0
        %v524 = vlog2.pop %v523
        %v525 = vmul.f32 %v524, 0.6931472
        %v526 = vmul.f32 -0.5, %v522
        %v527 = vadd.f32 %v526, 1.0
        %v528 = vmul.f32 %v527, %v522
        %v529 = vand.u32 2147483647, %v522
        %vm530 = vcmp.lt.f32.partialorder %v529, 0.0004427343
        %v531 = vsel %vm530, %v528, %v525
        %v532 = vadd.f32 %v518, %v531
        %v533 = vmul.f32 %v532, %v513
        %vm534 = vcmask 1040384
        %v535 = vsel %vm534, %v533, 0.0
        %536 = vadd.xlane.f32.xlu0 %v535
        %v537 = vpop.xlane.xlu0 %536
        %v538 = vrot.slane %v537, 4
        %v539 = vadd.f32 %v537, %v538
        %v540 = vrot.slane %v539, 2
        %v541 = vadd.f32 %v539, %v540
        %v542 = vrot.slane %v541, 1
        %v543 = vadd.f32 %v541, %v542
        %s544 = vtos %v543
        %s545 = sadd.f32 %s514, %s544
        %s546 = scalar_lea.smem [#allocation2], 1
        %547 = sst [smem:[%s546]] %s545
        %s548 = sld [smem:[#allocation2]]
        %s549 = smul.f32 %s548, 0.125
        %s550 = sld [smem:[#allocation2 + $0x1]]
        %s551 = smul.f32 %s550, 0.005
        %s552 = smul.f32 %s551, 0.5
        %s553 = sadd.f32 %s549, %s552
        %s554 = smul.f32 %s553, 0.6666667
        %s555 = scalar_lea.smem [#allocation11], 0
        %556 = sst [smem:[%s555]] %s554
        %s557 = scalar_lea.smem [#allocation11], 1
        %558 = sst [smem:[%s557]] %s549
        %s559 = scalar_lea.smem [#allocation11], 2
        %560 = sst [smem:[%s559]] %s551
        %s561 = sand.u32 %s191, 1
        %s562 = scalar_lea.sflag [#allocation10], %s561
        %s563 = sand.u32 %s191, 1
        %s564 = scalar_lea.vmem [#allocation9], %s563
        // Predicated region
        $region91: #{tpu_custom_call.1} parent=77 // pred_check
          %p565 = pneg %p175
        $region92: #{tpu_custom_call.1} parent=77 // pred_check_branch
          %567 = sbr.rel (%p565) target = $region94
        $region93: #{tpu_custom_call.1} parent=77 // pred_region
          %s569 = ssub.s32 16, 16
          %570 = vsyncadd [#allocation5], %s569
          %s572 = sshll.u32 [#allocation8], 4
          %s573 = int_to_ptr.vmem [resolvable:$true] %s572
          %575 = dma.vmem_to_hbm [thread:$0]  %s573, 16, %s6, [#allocation5]
        $region94: #{tpu_custom_call.1} parent=77 // pred_fallthru
          _
        // Predicated region
        $region95: #{tpu_custom_call.1} parent=77 // pred_check
          %p576 = pneg %p201
        $region96: #{tpu_custom_call.1} parent=77 // pred_check_branch
          %578 = sbr.rel (%p576) target = $region98
        $region97: #{tpu_custom_call.1} parent=77 // pred_region
          %s580 = ssub.s32 16, 16
          %581 = vsyncadd %s562, %s580
          %s582 = smul.addr %s26, 16
          %s583 = scalar_lea.hbm %s7, %s582
          %s585 = sshll.u32 %s564, 4
          %s586 = int_to_ptr.vmem [resolvable:$true] %s585
          %588 = dma.vmem_to_hbm [thread:$0]  %s586, 16, %s583, %s562
        $region98: #{tpu_custom_call.1} parent=77 // pred_fallthru
          _
        // Predicated region
        $region99: #{tpu_custom_call.1} parent=77 // pred_check
          %p589 = pneg %p222
        $region100: #{tpu_custom_call.1} parent=77 // pred_check_branch
          %591 = sbr.rel (%p589) target = $region102
        $region101: #{tpu_custom_call.1} parent=77 // pred_region
          %s593 = ssub.s32 16, 16
          %594 = vsyncadd [#allocation6], %s593
          %597 = dma.smem_to_hbm [#allocation11], 16, %s8, [#allocation6]
        $region102: #{tpu_custom_call.1} parent=77 // pred_fallthru
          _
        // Predicated region
        $region103: #{tpu_custom_call.1} parent=77 // pred_check
          %p598 = pneg %p175
        $region104: #{tpu_custom_call.1} parent=77 // pred_check_branch
          %600 = sbr.rel (%p598) target = $region106
        $region105: #{tpu_custom_call.1} parent=77 // pred_region
          %601 = dma.done [#allocation5], 16
        $region106: #{tpu_custom_call.1} parent=77 // pred_fallthru
          _
        // Predicated region
        $region107: #{tpu_custom_call.1} parent=77 // pred_check
          %p602 = pneg %p222
        $region108: #{tpu_custom_call.1} parent=77 // pred_check_branch
          %604 = sbr.rel (%p602) target = $region110
        $region109: #{tpu_custom_call.1} parent=77 // pred_region
          %605 = dma.done [#allocation6], 16
        $region110: #{tpu_custom_call.1} parent=77 // pred_fallthru
          _
        %606 = sfence
      $region78: #{tpu_custom_call.1} parent=5 // pred_fallthru
        _
      %p607 = scmp.le.s32.totalorder 2, %s21
      // Predicated region
      $region111: #{tpu_custom_call.1} parent=5 // pred_check
        %p608 = pneg %p607
      $region112: #{tpu_custom_call.1} parent=5 // pred_check_branch
        %610 = sbr.rel (%p608) target = $region114
      $region113: #{tpu_custom_call.1} parent=5 // pred_region
        %s611 = ssub.s32 %s21, 2
        // Predicated region
        $region115: #{tpu_custom_call.1} parent=113 // pred_check
          %p612 = pneg %p207
        $region116: #{tpu_custom_call.1} parent=113 // pred_check_branch
          %614 = sbr.rel (%p612) target = $region118
        $region117: #{tpu_custom_call.1} parent=113 // pred_region
          %s615 = sand.u32 %s192, 1
          %s616 = scalar_lea.sflag [#allocation10], %s615
          %s617 = sand.u32 %s192, 1
          %s618 = scalar_lea.vmem [#allocation9], %s617
          %619 = dma.done %s616, 16
        $region118: #{tpu_custom_call.1} parent=113 // pred_fallthru
          _
      $region114: #{tpu_custom_call.1} parent=5 // pred_fallthru
        _
    $region6: #{tpu_custom_call.1} parent=1 // loop_footer
      %s25 = sadd.s32 1, %s21
    $region7: #{tpu_custom_call.1} parent=1 // loop_footer_branch
      %20 = sbr.rel target = $region3
    $region8: #{tpu_custom_call.1} parent=1 // loop_exit
      _
    %620 = vsyncpa [#allocation5], 1
    %s621 = scalar_lea.sflag [#allocation5], 1
    %622 = vsyncpa %s621, 1
    %623 = vsyncpa [#allocation10], 1
    %s624 = scalar_lea.sflag [#allocation10], 1
    %625 = vsyncpa %s624, 1
    %626 = vsyncpa [#allocation6], 1
    %s627 = scalar_lea.sflag [#allocation6], 1
    %628 = vsyncpa %s627, 1
    %629 = vsyncpa [#allocation7], 1
    %s630 = scalar_lea.sflag [#allocation7], 1
    %631 = vsyncpa %s630, 1

</llo_original>
